<compile_context>
chip_gen: v5e
topology: v5e:2x2
jax: 0.10.0
libtpu: 0.0.40
codegen_flags: <defaults>
</compile_context>

<pallas_src>
import functools

import jax
import jax.numpy as jnp
from jax.experimental import pallas as pl
from jax.experimental.pallas import tpu as pltpu


def _round_up(x, m):
    return ((x + m - 1) // m) * m


def _choose_block_b(B):
    """Batch tile: big (amortize per-step overhead), multiple of 128 lanes for
    the transposed output block, >=2 grid steps for v7x megacore when the
    batch is large enough, and capped at 4096 so double-buffered tiles stay
    well inside v5e's 16 MiB scoped-VMEM default."""
    B128 = _round_up(B, 128)
    if B128 <= 2048:
        return B128                       # single step; splitting adds overhead
    return min(4096, _round_up((B128 + 1) // 2, 128))


# ---------------------------------------------------------------------------
# One-time parameter prep (hoisted out of the per-call forward path).
# ---------------------------------------------------------------------------
def fold_dueling_params(w1, b1, wv, bv, wa, ba):
    """Fold value + advantage + mean-subtraction into one head and lay it out
    for the transposed (batch-in-lanes) output:

        q = (h@wv + bv) + (h@wa + ba) - mean_j(h@wa + ba)
          = h @ (wa + wv - mean_j(wa)) + (ba + bv - mean_j(ba))

    Returns (w1 [Din,H], b1 [1,H], wq_t [A_pad,H], bq_t [A_pad,1]) with the
    action dim zero-padded up to 8 sublanes."""
    A = wa.shape[1]
    wq = wa + wv - jnp.mean(wa, axis=1, keepdims=True)        # [H, A]
    bq = ba + bv - jnp.mean(ba, axis=1, keepdims=True)        # [1, A]
    A_pad = _round_up(A, 8)
    wq_t = jnp.pad(wq.T, ((0, A_pad - A), (0, 0)))            # [A_pad, H]
    bq_t = jnp.pad(bq.T, ((0, A_pad - A), (0, 0)))            # [A_pad, 1]
    return w1, b1, wq_t, bq_t


# ---------------------------------------------------------------------------
# Kernel: two MXU dots, transposed (lane-dense, 8-sublane) output.
# ---------------------------------------------------------------------------
def dueling_qnet_kernel(x_ref, w1_ref, b1_ref, wqt_ref, bqt_ref, qt_ref):
    # fc1 + ReLU (MXU matmul, f32 accumulation; VPU add/max).   h: [bb, H]
    h = jnp.dot(x_ref[...], w1_ref[...], preferred_element_type=jnp.float32)
    h = jnp.maximum(h + b1_ref[...], 0.0)

    # Folded dueling head, written transposed (batch in lanes):
    #   qT[a, m] = sum_k WqT[a, k] * h[m, k]        (A @ B^T on the MXU)
    qt = jax.lax.dot_general(
        wqt_ref[...], h,
        dimension_numbers=(((1,), (1,)), ((), ())),
        preferred_element_type=jnp.float32)                   # [A_pad, bb]
    qt_ref[...] = (qt + bqt_ref[...]).astype(qt_ref.dtype)


# ---------------------------------------------------------------------------
# Jitted forward on pre-folded params.
# ---------------------------------------------------------------------------
@functools.partial(jax.jit, static_argnames=("num_actions", "block_b"))
def dueling_qnet_forward(x, w1, b1, wq_t, bq_t, *, num_actions, block_b=None):
    """x: [B, input_size]; (w1, b1, wq_t, bq_t) from fold_dueling_params.
    Returns q: [B, num_actions]."""
    B, Din = x.shape
    H = w1.shape[1]
    A_pad = wq_t.shape[0]

    if block_b is None:
        bb = _choose_block_b(B)
    else:
        bb = _round_up(min(block_b, _round_up(B, 128)), 128)

    B_pad = _round_up(B, bb)
    if B_pad != B:
        x = jnp.pad(x, ((0, B_pad - B), (0, 0)))   # padded rows sliced off below
    grid = (B_pad // bb,)

    full = lambda arr: pl.BlockSpec(arr.shape, lambda i: (0,) * arr.ndim)

    itemsize = jnp.dtype(x.dtype).itemsize
    flops = 2 * B_pad * (Din * H + H * A_pad)
    bytes_accessed = (B_pad * Din * itemsize            # x read
                      + A_pad * B_pad * 4               # qT write
                      + (w1.size + b1.size + wq_t.size + bq_t.size) * 4)

    qt_pad = pl.pallas_call(
        dueling_qnet_kernel,
        out_shape=jax.ShapeDtypeStruct((A_pad, B_pad), jnp.float32),
        grid=grid,
        in_specs=[
            pl.BlockSpec((bb, Din), lambda i: (i, 0)),  # x: streamed batch tiles
            full(w1),                                   # tiny weights: resident
            full(b1),
            full(wq_t),
            full(bq_t),
        ],
        out_specs=pl.BlockSpec((A_pad, bb), lambda i: (0, i)),  # batch in lanes
        compiler_params=pltpu.CompilerParams(
            dimension_semantics=("parallel",)),         # v7x: shard batch tiles
        cost_estimate=pl.CostEstimate(
            flops=flops, transcendentals=0, bytes_accessed=bytes_accessed),
    )(x, w1, b1, wq_t, bq_t)

    return qt_pad[:num_actions, :B].T                   # [B, A]


# ---------------------------------------------------------------------------
# Deterministic init mimicking PyTorch's default uniform(-1/sqrt(fan_in)).
# ---------------------------------------------------------------------------
def init_params(key, input_size, hidden_size, output_size):
    ks = jax.random.split(key, 6)

    def lin(kw, kb, fan_in, fan_out):
        bound = 1.0 / jnp.sqrt(float(fan_in))
        w = jax.random.uniform(kw, (fan_in, fan_out), jnp.float32, -bound, bound)
        b = jax.random.uniform(kb, (1, fan_out), jnp.float32, -bound, bound)
        return w, b

    w1, b1 = lin(ks[0], ks[1], input_size, hidden_size)
    wv, bv = lin(ks[2], ks[3], hidden_size, 1)
    wa, ba = lin(ks[4], ks[5], hidden_size, output_size)
    return w1, b1, wv, bv, wa, ba


if __name__ == "__main__":
    INPUT_SIZE = 16
    HIDDEN_SIZE = 32
    OUTPUT_SIZE = 4
    BATCH = 64

    key = jax.random.PRNGKey(0)
    kx, kp = jax.random.split(key)
    x = jax.random.normal(kx, (BATCH, INPUT_SIZE), jnp.float32)
    w1, b1, wv, bv, wa, ba = init_params(kp, INPUT_SIZE, HIDDEN_SIZE, OUTPUT_SIZE)

    # One-time parameter prep (fold/transpose/pad), outside the forward path.
    w1_p, b1_p, wq_t, bq_t = fold_dueling_params(w1, b1, wv, bv, wa, ba)

    q = dueling_qnet_forward(x, w1_p, b1_p, wq_t, bq_t, num_actions=OUTPUT_SIZE)
    q = jax.block_until_ready(q)

    # Pure-JAX reference (same math as the PyTorch module, un-folded).
    h = jnp.maximum(x @ w1 + b1, 0.0)
    v = h @ wv + bv
    a = h @ wa + ba
    q_ref = v + (a - a.mean(axis=1, keepdims=True))

    assert q.shape == (BATCH, OUTPUT_SIZE)
    assert jnp.allclose(q, q_ref, atol=1e-5, rtol=1e-5)

    print("KERNEL_OK")
</pallas_src>

<mosaic_0001>
module attributes {stable_mosaic.version = 11 : i64} {
  func.func @dueling_qnet_kernel(%arg0: i32, %arg1: memref<128x16xf32, #tpu.memory_space<vmem>>, %arg2: memref<16x32xf32, #tpu.memory_space<vmem>>, %arg3: memref<1x32xf32, #tpu.memory_space<vmem>>, %arg4: memref<8x32xf32, #tpu.memory_space<vmem>>, %arg5: memref<8x1xf32, #tpu.memory_space<vmem>>, %arg6: memref<8x128xf32, #tpu.memory_space<vmem>>) attributes {dimension_semantics = [#tpu.dimension_semantics<parallel>], iteration_bounds = array<i64: 1>, scalar_prefetch = 0 : i64, scratch_operands = 0 : i64, tpu.core_type = #tpu.core_type<tc>, window_params = [{transform_indices = @transform_0, window_bounds = array<i64: 128, 16>}, {pipeline_mode = #tpu.pipeline_mode<synchronous>, transform_indices = @transform_1, window_bounds = array<i64: 16, 32>}, {pipeline_mode = #tpu.pipeline_mode<synchronous>, transform_indices = @transform_2, window_bounds = array<i64: 1, 32>}, {pipeline_mode = #tpu.pipeline_mode<synchronous>, transform_indices = @transform_3, window_bounds = array<i64: 8, 32>}, {pipeline_mode = #tpu.pipeline_mode<synchronous>, transform_indices = @transform_4, window_bounds = array<i64: 8, 1>}, {transform_indices = @transform_5, window_bounds = array<i64: 8, 128>}]} {
    %c0 = arith.constant 0 : index
    %c0_0 = arith.constant 0 : index
    %0 = vector.load %arg1[%c0, %c0_0] : memref<128x16xf32, #tpu.memory_space<vmem>>, vector<128x16xf32>
    %c0_1 = arith.constant 0 : index
    %c0_2 = arith.constant 0 : index
    %1 = vector.load %arg2[%c0_1, %c0_2] : memref<16x32xf32, #tpu.memory_space<vmem>>, vector<16x32xf32>
    %cst = arith.constant dense<0.000000e+00> : vector<128x32xf32>
    %2 = tpu.matmul %0, %1, %cst {dimension_numbers = #tpu.dot_dimension_numbers<[1], [0], [0], [1], [0, 0, 1, 1], [], []>} : vector<128x16xf32>, vector<16x32xf32>, vector<128x32xf32> -> vector<128x32xf32>
    %c0_3 = arith.constant 0 : index
    %c0_4 = arith.constant 0 : index
    %3 = vector.load %arg3[%c0_3, %c0_4] : memref<1x32xf32, #tpu.memory_space<vmem>>, vector<1x32xf32>
    %4 = vector.broadcast %3 : vector<1x32xf32> to vector<128x32xf32>
    %5 = arith.addf %2, %4 : vector<128x32xf32>
    %cst_5 = arith.constant 0.000000e+00 : f32
    %6 = vector.broadcast %cst_5 : f32 to vector<128x32xf32>
    %7 = arith.maximumf %5, %6 : vector<128x32xf32>
    %c0_6 = arith.constant 0 : index
    %c0_7 = arith.constant 0 : index
    %8 = vector.load %arg4[%c0_6, %c0_7] : memref<8x32xf32, #tpu.memory_space<vmem>>, vector<8x32xf32>
    %cst_8 = arith.constant dense<0.000000e+00> : vector<8x128xf32>
    %9 = tpu.matmul %8, %7, %cst_8 {dimension_numbers = #tpu.dot_dimension_numbers<[1], [1], [0], [0], [0, 0, 1, 0], [], []>} : vector<8x32xf32>, vector<128x32xf32>, vector<8x128xf32> -> vector<8x128xf32>
    %c0_9 = arith.constant 0 : index
    %c0_10 = arith.constant 0 : index
    %10 = vector.load %arg5[%c0_9, %c0_10] : memref<8x1xf32, #tpu.memory_space<vmem>>, vector<8x1xf32>
    %11 = vector.broadcast %10 : vector<8x1xf32> to vector<8x128xf32>
    %12 = arith.addf %9, %11 : vector<8x128xf32>
    %c0_11 = arith.constant 0 : index
    %c0_12 = arith.constant 0 : index
    %13 = vector.load %arg6[%c0_11, %c0_12] : memref<8x128xf32, #tpu.memory_space<vmem>>, vector<8x128xf32>
    tpu.vector_store %arg6[%c0_11, %c0_12], %12 {strides = array<i32>} : memref<8x128xf32, #tpu.memory_space<vmem>>, vector<8x128xf32>,
    return
  }
  func.func @transform_0(%arg0: i32) -> (i32, i32) {
    %c0_i32 = arith.constant 0 : i32
    %c0_i32_0 = arith.constant 0 : i32
    return %arg0, %c0_i32 : i32, i32
  }
  func.func @transform_1(%arg0: i32) -> (i32, i32) {
    %c0_i32 = arith.constant 0 : i32
    %c0_i32_0 = arith.constant 0 : i32
    %c0_i32_1 = arith.constant 0 : i32
    return %c0_i32, %c0_i32_0 : i32, i32
  }
  func.func @transform_2(%arg0: i32) -> (i32, i32) {
    %c0_i32 = arith.constant 0 : i32
    %c0_i32_0 = arith.constant 0 : i32
    %c0_i32_1 = arith.constant 0 : i32
    return %c0_i32, %c0_i32_0 : i32, i32
  }
  func.func @transform_3(%arg0: i32) -> (i32, i32) {
    %c0_i32 = arith.constant 0 : i32
    %c0_i32_0 = arith.constant 0 : i32
    %c0_i32_1 = arith.constant 0 : i32
    return %c0_i32, %c0_i32_0 : i32, i32
  }
  func.func @transform_4(%arg0: i32) -> (i32, i32) {
    %c0_i32 = arith.constant 0 : i32
    %c0_i32_0 = arith.constant 0 : i32
    %c0_i32_1 = arith.constant 0 : i32
    return %c0_i32, %c0_i32_0 : i32, i32
  }
  func.func @transform_5(%arg0: i32) -> (i32, i32) {
    %c0_i32 = arith.constant 0 : i32
    %c0_i32_0 = arith.constant 0 : i32
    return %c0_i32, %arg0 : i32, i32
  }
}

</mosaic_0001>

<llo_original>
// kernel: dueling_qnet_forward.1
$region0: #{dueling_qnet_forward.1}
  #allocation0 [shape = 'u32[]', space=smem, size = 0x4, offset = 0x4, fixed_abs, tag = 'smem constant byte address 0x4 - core index']
  #allocation1 [shape = 'u32[72,128]{1,0:T(1,128)}', space=vmem, size = 0x9000, scoped, tag = 'internal scratch']
  %s0 = inlined_call_operand.vmem [shape: f32[128,16], index: 0, kind: input, shape index: {}]
  %s1 = inlined_call_operand.vmem [shape: f32[16,32], index: 1, kind: input, shape index: {}]
  %s2 = inlined_call_operand.vmem [shape: f32[1,32], index: 2, kind: input, shape index: {}]
  %s3 = inlined_call_operand.vmem [shape: f32[8,32], index: 3, kind: input, shape index: {}]
  %s4 = inlined_call_operand.vmem [shape: f32[8,1], index: 4, kind: input, shape index: {}]
  %s5 = inlined_call_operand.vmem [shape: f32[8,128], index: 5, kind: output, shape index: {}]
  %s6 = sld [smem:[#allocation0]]
  $region30: #{dueling_qnet_forward.1} parent=0
    _
  %s8 = ssub.s32 1, %s6
  %s9 = scalar_select 0, %s8, %s6
  // Predicated region
  $region2: #{dueling_qnet_forward.1} parent=0 // pred_check
    _
  $region3: #{dueling_qnet_forward.1} parent=0 // pred_check_branch
    %11 = sbr.rel (0) target = $region5
  $region4: #{dueling_qnet_forward.1} parent=0 // pred_region
    _
  $region5: #{dueling_qnet_forward.1} parent=0 // pred_fallthru
    _
  // Predicated region
  $region6: #{dueling_qnet_forward.1} parent=0 // pred_check
    _
  $region7: #{dueling_qnet_forward.1} parent=0 // pred_check_branch
    %13 = sbr.rel (0) target = $region9
  $region8: #{dueling_qnet_forward.1} parent=0 // pred_region
    _
  $region9: #{dueling_qnet_forward.1} parent=0 // pred_fallthru
    _
  // Predicated region
  $region10: #{dueling_qnet_forward.1} parent=0 // pred_check
    _
  $region11: #{dueling_qnet_forward.1} parent=0 // pred_check_branch
    %15 = sbr.rel (0) target = $region13
  $region12: #{dueling_qnet_forward.1} parent=0 // pred_region
    _
  $region13: #{dueling_qnet_forward.1} parent=0 // pred_fallthru
    _
  // Predicated region
  $region14: #{dueling_qnet_forward.1} parent=0 // pred_check
    _
  $region15: #{dueling_qnet_forward.1} parent=0 // pred_check_branch
    %17 = sbr.rel (0) target = $region17
  $region16: #{dueling_qnet_forward.1} parent=0 // pred_region
    _
  $region17: #{dueling_qnet_forward.1} parent=0 // pred_fallthru
    _
  // Predicated region
  $region18: #{dueling_qnet_forward.1} parent=0 // pred_check
    _
  $region19: #{dueling_qnet_forward.1} parent=0 // pred_check_branch
    %19 = sbr.rel (0) target = $region21
  $region20: #{dueling_qnet_forward.1} parent=0 // pred_region
    _
  $region21: #{dueling_qnet_forward.1} parent=0 // pred_fallthru
    _
  %v20 = vld [vmem:[%s0] sm:$0xff]
  %v21 = vld [vmem:[%s0 + $0x8] sm:$0xff]
  %v22 = vld [vmem:[%s0 + $0x10] sm:$0xff]
  %v23 = vld [vmem:[%s0 + $0x18] sm:$0xff]
  %v24 = vld [vmem:[%s0 + $0x20] sm:$0xff]
  %v25 = vld [vmem:[%s0 + $0x28] sm:$0xff]
  %v26 = vld [vmem:[%s0 + $0x30] sm:$0xff]
  %v27 = vld [vmem:[%s0 + $0x38] sm:$0xff]
  %v28 = vld [vmem:[%s0 + $0x40] sm:$0xff]
  %v29 = vld [vmem:[%s0 + $0x48] sm:$0xff]
  %v30 = vld [vmem:[%s0 + $0x50] sm:$0xff]
  %v31 = vld [vmem:[%s0 + $0x58] sm:$0xff]
  %v32 = vld [vmem:[%s0 + $0x60] sm:$0xff]
  %v33 = vld [vmem:[%s0 + $0x68] sm:$0xff]
  %v34 = vld [vmem:[%s0 + $0x70] sm:$0xff]
  %v35 = vld [vmem:[%s0 + $0x78] sm:$0xff]
  %v36 = vld [vmem:[%s1] sm:$0xff]
  %v37 = vld [vmem:[%s1 + $0x8] sm:$0xff]
  %v38 = vld [vmem:[%s2] sm:$0x1]
  %v40 = vperm.slane %v38, 0
  %vm42 = vcmask 130048
  %v44 = vsel %vm42, %v20, 0
  %v47 = vsel %vm42, %v21, 0
  %v50 = vsel %vm42, %v22, 0
  %v53 = vsel %vm42, %v23, 0
  %v56 = vsel %vm42, %v24, 0
  %v59 = vsel %vm42, %v25, 0
  %v62 = vsel %vm42, %v26, 0
  %v65 = vsel %vm42, %v27, 0
  %v68 = vsel %vm42, %v28, 0
  %v71 = vsel %vm42, %v29, 0
  %v74 = vsel %vm42, %v30, 0
  %v77 = vsel %vm42, %v31, 0
  %v80 = vsel %vm42, %v32, 0
  %v83 = vsel %vm42, %v33, 0
  %v86 = vsel %vm42, %v34, 0
  %v89 = vsel %vm42, %v35, 0
  %91 = vmatpush.msra.mxu0 0.0
  %92 = vmatpush.msra.mxu0 0.0
  %93 = vmatpush.msra.mxu0 0.0
  %94 = vmatpush.msra.mxu0 0.0
  %95 = vmatpush.msra.mxu0 0.0
  %96 = vmatpush.msra.mxu0 0.0
  %97 = vmatpush.msra.mxu0 0.0
  %98 = vmatpush.msra.mxu0 0.0
  %99 = vmatpush.msra.mxu0 0.0
  %100 = vmatpush.msra.mxu0 0.0
  %101 = vmatpush.msra.mxu0 0.0
  %102 = vmatpush.msra.mxu0 0.0
  %103 = vmatpush.msra.mxu0 0.0
  %104 = vmatpush.msra.mxu0 0.0
  %105 = vmatpush.msra.mxu0 %v37
  %106 = vmatpush.msra.mxu0 %v36
  %107 = vmatmul.f32.gmra.mxu0 %v44
  %v108 = vpop.f32.mrf.mxu0
  %v109 = vadd.f32 %v40, %v108
  %110 = vmatmul.f32.gmra.mxu0 %v47
  %v111 = vpop.f32.mrf.mxu0
  %v112 = vadd.f32 %v40, %v111
  %113 = vmatmul.f32.gmra.mxu0 %v50
  %v114 = vpop.f32.mrf.mxu0
  %v115 = vadd.f32 %v40, %v114
  %116 = vmatmul.f32.gmra.mxu0 %v53
  %v117 = vpop.f32.mrf.mxu0
  %v118 = vadd.f32 %v40, %v117
  %119 = vmatmul.f32.gmra.mxu0 %v56
  %v120 = vpop.f32.mrf.mxu0
  %v121 = vadd.f32 %v40, %v120
  %122 = vmatmul.f32.gmra.mxu0 %v59
  %v123 = vpop.f32.mrf.mxu0
  %v124 = vadd.f32 %v40, %v123
  %125 = vmatmul.f32.gmra.mxu0 %v62
  %v126 = vpop.f32.mrf.mxu0
  %v127 = vadd.f32 %v40, %v126
  %128 = vmatmul.f32.gmra.mxu0 %v65
  %v129 = vpop.f32.mrf.mxu0
  %v130 = vadd.f32 %v40, %v129
  %131 = vmatmul.f32.gmra.mxu0 %v68
  %v132 = vpop.f32.mrf.mxu0
  %v133 = vadd.f32 %v40, %v132
  %134 = vmatmul.f32.gmra.mxu0 %v71
  %v135 = vpop.f32.mrf.mxu0
  %v136 = vadd.f32 %v40, %v135
  %137 = vmatmul.f32.gmra.mxu0 %v74
  %v138 = vpop.f32.mrf.mxu0
  %v139 = vadd.f32 %v40, %v138
  %140 = vmatmul.f32.gmra.mxu0 %v77
  %v141 = vpop.f32.mrf.mxu0
  %v142 = vadd.f32 %v40, %v141
  %143 = vmatmul.f32.gmra.mxu0 %v80
  %v144 = vpop.f32.mrf.mxu0
  %v145 = vadd.f32 %v40, %v144
  %146 = vmatmul.f32.gmra.mxu0 %v83
  %v147 = vpop.f32.mrf.mxu0
  %v148 = vadd.f32 %v40, %v147
  %149 = vmatmul.f32.gmra.mxu0 %v86
  %v150 = vpop.f32.mrf.mxu0
  %v151 = vadd.f32 %v40, %v150
  %152 = vmatmul.f32.gmra.mxu0 %v89
  %v153 = vpop.f32.mrf.mxu0
  %v154 = vadd.f32 %v40, %v153
  %155 = vdwg.mxu0
  %v156 = vmax.f32 %v109, 0.0
  %v157 = vmax.f32 %v112, 0.0
  %v158 = vmax.f32 %v115, 0.0
  %v159 = vmax.f32 %v118, 0.0
  %v160 = vmax.f32 %v121, 0.0
  %v161 = vmax.f32 %v124, 0.0
  %v162 = vmax.f32 %v127, 0.0
  %v163 = vmax.f32 %v130, 0.0
  %v164 = vmax.f32 %v133, 0.0
  %v165 = vmax.f32 %v136, 0.0
  %v166 = vmax.f32 %v139, 0.0
  %v167 = vmax.f32 %v142, 0.0
  %v168 = vmax.f32 %v145, 0.0
  %v169 = vmax.f32 %v148, 0.0
  %v170 = vmax.f32 %v151, 0.0
  %v171 = vmax.f32 %v154, 0.0
  %v172 = vld [vmem:[%s3] sm:$0xff]
  %v173 = vld [vmem:[%s4] sm:$0xff]
  %175 = vset.pattern.permute.xlu0 0
  %176 = vperm.xlu0 %175, %v173
  %v177 = vpop.permute.xlu0 %176
  %vm179 = vcmask 261120
  %v181 = vsel %vm179, %v172, 0
  %v184 = vsel %vm179, %v156, 0
  %v187 = vsel %vm179, %v157, 0
  %v190 = vsel %vm179, %v158, 0
  %v193 = vsel %vm179, %v159, 0
  %v196 = vsel %vm179, %v160, 0
  %v199 = vsel %vm179, %v161, 0
  %v202 = vsel %vm179, %v162, 0
  %v205 = vsel %vm179, %v163, 0
  %v208 = vsel %vm179, %v164, 0
  %v211 = vsel %vm179, %v165, 0
  %v214 = vsel %vm179, %v166, 0
  %v217 = vsel %vm179, %v167, 0
  %v220 = vsel %vm179, %v168, 0
  %v223 = vsel %vm179, %v169, 0
  %v226 = vsel %vm179, %v170, 0
  %v229 = vsel %vm179, %v171, 0
  %231 = vmatpush.xpose.msra.mxu0 %v229
  %232 = vmatpush.xpose.msra.mxu0 %v226
  %233 = vmatpush.xpose.msra.mxu0 %v223
  %234 = vmatpush.xpose.msra.mxu0 %v220
  %235 = vmatpush.xpose.msra.mxu0 %v217
  %236 = vmatpush.xpose.msra.mxu0 %v214
  %237 = vmatpush.xpose.msra.mxu0 %v211
  %238 = vmatpush.xpose.msra.mxu0 %v208
  %239 = vmatpush.xpose.msra.mxu0 %v205
  %240 = vmatpush.xpose.msra.mxu0 %v202
  %241 = vmatpush.xpose.msra.mxu0 %v199
  %242 = vmatpush.xpose.msra.mxu0 %v196
  %243 = vmatpush.xpose.msra.mxu0 %v193
  %244 = vmatpush.xpose.msra.mxu0 %v190
  %245 = vmatpush.xpose.msra.mxu0 %v187
  %246 = vmatpush.xpose.msra.mxu0 %v184
  %247 = vmatmul.f32.gmra.mxu0 %v181
  %v248 = vpop.f32.mrf.mxu0
  %v249 = vadd.f32 %v177, %v248
  %250 = vdwg.mxu0
  %251 = vst [vmem:[%s5] sm:$0xff] %v249
  // Predicated region
  $region22: #{dueling_qnet_forward.1} parent=0 // pred_check
    _
  $region23: #{dueling_qnet_forward.1} parent=0 // pred_check_branch
    %253 = sbr.rel (0) target = $region25
  $region24: #{dueling_qnet_forward.1} parent=0 // pred_region
    _
  $region25: #{dueling_qnet_forward.1} parent=0 // pred_fallthru
    _
  // Predicated region
  $region26: #{dueling_qnet_forward.1} parent=0 // pred_check
    _
  $region27: #{dueling_qnet_forward.1} parent=0 // pred_check_branch
    %255 = sbr.rel (0) target = $region29
  $region28: #{dueling_qnet_forward.1} parent=0 // pred_region
    _
  $region29: #{dueling_qnet_forward.1} parent=0 // pred_fallthru
    _

</llo_original>
